<compile_context>
chip_gen: v7x
topology: tpu7x:2x2x1
jax: 0.10.0
libtpu: 0.0.40
codegen_flags: <defaults>
</compile_context>

<pallas_src>
import functools

import jax
import jax.numpy as jnp
from jax.experimental import pallas as pl
from jax.experimental.pallas import tpu as pltpu

_LANE = 128


def _round_up(n, m):
    return ((n + m - 1) // m) * m


def _actor_kernel(x_ref, w1_ref, b1_ref, w2_ref, b2_ref, w3_ref, b3_ref,
                  o_ref, *, max_action: float):
    """One batch tile of the Actor MLP, fully fused (MXU matmuls, f32 epilogue)."""
    cdt = w1_ref.dtype  # compute dtype for the MXU (f32 or bf16)
    x = x_ref[...].astype(cdt)
    # Layer 1: relu(x @ W1 + b1)
    h1 = jnp.dot(x, w1_ref[...], preferred_element_type=jnp.float32)
    h1 = jnp.maximum(h1 + b1_ref[...], 0.0)
    # Layer 2: relu(h1 @ W2 + b2)
    h2 = jnp.dot(h1.astype(cdt), w2_ref[...], preferred_element_type=jnp.float32)
    h2 = jnp.maximum(h2 + b2_ref[...], 0.0)
    # Layer 3: max_action * tanh(h2 @ W3 + b3)   (tanh on the EUP, free slot)
    h3 = jnp.dot(h2.astype(cdt), w3_ref[...], preferred_element_type=jnp.float32)
    o_ref[...] = (max_action * jnp.tanh(h3 + b3_ref[...])).astype(o_ref.dtype)


def prepare_params(params, *, compute_dtype=jnp.float32):
    """One-time param preparation (do at init / checkpoint-load, NOT per call):
      - transpose PyTorch [out, in] weights to [in, out] so the kernel does x @ W,
      - zero-pad hidden and output dims up to multiples of 128 for lane-dense
        MXU tiles and unmasked stores,
      - optionally cast weights to bf16 (recommended on v6e / v7x MXUs).
    Padded lanes carry exact zeros (zero weights + zero biases), so they never
    contaminate real outputs and are simply sliced off in the wrapper."""
    w1 = params["w1"].T          # [state_dim, h1]
    w2 = params["w2"].T          # [h1, h2]
    w3 = params["w3"].T          # [h2, action_dim]

    H1 = _round_up(w1.shape[1], _LANE)
    H2 = _round_up(w2.shape[1], _LANE)
    A = _round_up(w3.shape[1], _LANE)

    def pad2(a, rows, cols):
        return jnp.pad(a, ((0, rows - a.shape[0]), (0, cols - a.shape[1])))

    return {
        "w1": pad2(w1, w1.shape[0], H1).astype(compute_dtype),
        "w2": pad2(w2, H1, H2).astype(compute_dtype),
        "w3": pad2(w3, H2, A).astype(compute_dtype),
        "b1": pad2(params["b1"][None, :], 1, H1).astype(jnp.float32),
        "b2": pad2(params["b2"][None, :], 1, H2).astype(jnp.float32),
        "b3": pad2(params["b3"][None, :], 1, A).astype(jnp.float32),
    }


def actor_forward(x, prepared, *, max_action, action_dim, tile_m=256):
    """x: [B, state_dim] f32, prepared: output of prepare_params().
    Returns [B, action_dim] f32."""
    B, state_dim = x.shape
    w1, b1 = prepared["w1"], prepared["b1"]
    w2, b2 = prepared["w2"], prepared["b2"]
    w3, b3 = prepared["w3"], prepared["b3"]
    out_pad = w3.shape[1]

    # Pad the batch so it tiles evenly into sublane-aligned (tm, .) blocks.
    tm = min(tile_m, _round_up(B, 8))
    b_pad = _round_up(B, tm)
    if b_pad != B:
        x = jnp.pad(x, ((0, b_pad - B), (0, 0)))

    resident = lambda i: (0, 0)  # weights/biases stay VMEM-resident across batch tiles
    kernel = functools.partial(_actor_kernel, max_action=float(max_action))

    out = pl.pallas_call(
        kernel,
        out_shape=jax.ShapeDtypeStruct((b_pad, out_pad), jnp.float32),
        grid=(b_pad // tm,),
        in_specs=[
            pl.BlockSpec((tm, state_dim), lambda i: (i, 0)),  # x: tiled over batch
            pl.BlockSpec(w1.shape, resident),
            pl.BlockSpec(b1.shape, resident),
            pl.BlockSpec(w2.shape, resident),
            pl.BlockSpec(b2.shape, resident),
            pl.BlockSpec(w3.shape, resident),
            pl.BlockSpec(b3.shape, resident),
        ],
        out_specs=pl.BlockSpec((tm, out_pad), lambda i: (i, 0)),  # lane-dense stores
        compiler_params=pltpu.CompilerParams(
            dimension_semantics=("parallel",),  # v7x: shard batch tiles across both TCs
        ),
    )(x, w1, b1, w2, b2, w3, b3)

    return out[:B, :action_dim]


def init_params(key, state_dim, action_dim, h1=100, h2=100):
    """Deterministic synthetic init matching nn.Linear's default (U(-k, k))."""
    keys = jax.random.split(key, 6)

    def linear(kw, kb, fan_in, fan_out):
        bound = 1.0 / jnp.sqrt(fan_in)
        w = jax.random.uniform(kw, (fan_out, fan_in), jnp.float32, -bound, bound)
        b = jax.random.uniform(kb, (fan_out,), jnp.float32, -bound, bound)
        return w, b

    w1, b1 = linear(keys[0], keys[1], state_dim, h1)
    w2, b2 = linear(keys[2], keys[3], h1, h2)
    w3, b3 = linear(keys[4], keys[5], h2, action_dim)
    return {"w1": w1, "b1": b1, "w2": w2, "b2": b2, "w3": w3, "b3": b3}


def actor_ref(x, params, max_action):
    h1 = jnp.maximum(x @ params["w1"].T + params["b1"], 0.0)
    h2 = jnp.maximum(h1 @ params["w2"].T + params["b2"], 0.0)
    return max_action * jnp.tanh(h2 @ params["w3"].T + params["b3"])


if __name__ == "__main__":
    # metaworld 'button-press-v2': obs dim 39, action dim 4, max_action 1.0
    STATE_DIM, ACTION_DIM, MAX_ACTION = 39, 4, 1.0

    key = jax.random.PRNGKey(0)
    k_params, k_x = jax.random.split(key)
    params = init_params(k_params, STATE_DIM, ACTION_DIM)

    fwd = jax.jit(functools.partial(
        actor_forward, max_action=MAX_ACTION, action_dim=ACTION_DIM, tile_m=128))

    # --- Batched path (the intended regime): 2 batch tiles, f32 weights ---
    B = 256
    x = jax.random.normal(k_x, (B, STATE_DIM), jnp.float32)
    prep_f32 = prepare_params(params, compute_dtype=jnp.float32)
    out = jax.block_until_ready(fwd(x, prep_f32))
    ref = actor_ref(x, params, MAX_ACTION)
    assert out.shape == (B, ACTION_DIM)
    assert jnp.allclose(out, ref, atol=1e-5, rtol=1e-5)

    # --- Small, non-aligned batch exercises the batch-padding path ---
    x_small = x[:4]
    out_small = jax.block_until_ready(fwd(x_small, prep_f32))
    assert out_small.shape == (4, ACTION_DIM)
    assert jnp.allclose(out_small, ref[:4], atol=1e-5, rtol=1e-5)

    # --- bf16 MXU operands (recommended on v6e/v7x), f32 accumulation/epilogue ---
    prep_bf16 = prepare_params(params, compute_dtype=jnp.bfloat16)
    out_bf16 = jax.block_until_ready(fwd(x, prep_bf16))
    assert out_bf16.shape == (B, ACTION_DIM)
    assert jnp.allclose(out_bf16, ref, atol=5e-2, rtol=5e-2)

    print("KERNEL_OK")
</pallas_src>

<mosaic_0001>
module attributes {stable_mosaic.version = 11 : i64} {
  func.func @_actor_kernel(%arg0: i32, %arg1: memref<128x39xf32, #tpu.memory_space<vmem>>, %arg2: memref<39x128xf32, #tpu.memory_space<vmem>>, %arg3: memref<1x128xf32, #tpu.memory_space<vmem>>, %arg4: memref<128x128xf32, #tpu.memory_space<vmem>>, %arg5: memref<1x128xf32, #tpu.memory_space<vmem>>, %arg6: memref<128x128xf32, #tpu.memory_space<vmem>>, %arg7: memref<1x128xf32, #tpu.memory_space<vmem>>, %arg8: memref<128x128xf32, #tpu.memory_space<vmem>>) attributes {dimension_semantics = [#tpu.dimension_semantics<parallel>], iteration_bounds = array<i64: 2>, scalar_prefetch = 0 : i64, scratch_operands = 0 : i64, tpu.core_type = #tpu.core_type<tc>, window_params = [{transform_indices = @transform_0, window_bounds = array<i64: 128, 39>}, {pipeline_mode = #tpu.pipeline_mode<synchronous>, transform_indices = @transform_1, window_bounds = array<i64: 39, 128>}, {pipeline_mode = #tpu.pipeline_mode<synchronous>, transform_indices = @transform_2, window_bounds = array<i64: 1, 128>}, {pipeline_mode = #tpu.pipeline_mode<synchronous>, transform_indices = @transform_3, window_bounds = array<i64: 128, 128>}, {pipeline_mode = #tpu.pipeline_mode<synchronous>, transform_indices = @transform_4, window_bounds = array<i64: 1, 128>}, {pipeline_mode = #tpu.pipeline_mode<synchronous>, transform_indices = @transform_5, window_bounds = array<i64: 128, 128>}, {pipeline_mode = #tpu.pipeline_mode<synchronous>, transform_indices = @transform_6, window_bounds = array<i64: 1, 128>}, {transform_indices = @transform_7, window_bounds = array<i64: 128, 128>}]} {
    %c0 = arith.constant 0 : index
    %c0_0 = arith.constant 0 : index
    %0 = vector.load %arg1[%c0, %c0_0] : memref<128x39xf32, #tpu.memory_space<vmem>>, vector<128x39xf32>
    %c0_1 = arith.constant 0 : index
    %c0_2 = arith.constant 0 : index
    %1 = vector.load %arg2[%c0_1, %c0_2] : memref<39x128xf32, #tpu.memory_space<vmem>>, vector<39x128xf32>
    %cst = arith.constant dense<0.000000e+00> : vector<128x128xf32>
    %2 = tpu.matmul %0, %1, %cst {dimension_numbers = #tpu.dot_dimension_numbers<[1], [0], [0], [1], [0, 0, 1, 1], [], []>} : vector<128x39xf32>, vector<39x128xf32>, vector<128x128xf32> -> vector<128x128xf32>
    %c0_3 = arith.constant 0 : index
    %c0_4 = arith.constant 0 : index
    %3 = vector.load %arg3[%c0_3, %c0_4] : memref<1x128xf32, #tpu.memory_space<vmem>>, vector<1x128xf32>
    %4 = vector.broadcast %3 : vector<1x128xf32> to vector<128x128xf32>
    %5 = arith.addf %2, %4 : vector<128x128xf32>
    %cst_5 = arith.constant 0.000000e+00 : f32
    %6 = vector.broadcast %cst_5 : f32 to vector<128x128xf32>
    %7 = arith.maximumf %5, %6 : vector<128x128xf32>
    %c0_6 = arith.constant 0 : index
    %c0_7 = arith.constant 0 : index
    %8 = vector.load %arg4[%c0_6, %c0_7] : memref<128x128xf32, #tpu.memory_space<vmem>>, vector<128x128xf32>
    %cst_8 = arith.constant dense<0.000000e+00> : vector<128x128xf32>
    %9 = tpu.matmul %7, %8, %cst_8 {dimension_numbers = #tpu.dot_dimension_numbers<[1], [0], [0], [1], [0, 0, 1, 1], [], []>} : vector<128x128xf32>, vector<128x128xf32>, vector<128x128xf32> -> vector<128x128xf32>
    %c0_9 = arith.constant 0 : index
    %c0_10 = arith.constant 0 : index
    %10 = vector.load %arg5[%c0_9, %c0_10] : memref<1x128xf32, #tpu.memory_space<vmem>>, vector<1x128xf32>
    %11 = vector.broadcast %10 : vector<1x128xf32> to vector<128x128xf32>
    %12 = arith.addf %9, %11 : vector<128x128xf32>
    %cst_11 = arith.constant 0.000000e+00 : f32
    %13 = vector.broadcast %cst_11 : f32 to vector<128x128xf32>
    %14 = arith.maximumf %12, %13 : vector<128x128xf32>
    %c0_12 = arith.constant 0 : index
    %c0_13 = arith.constant 0 : index
    %15 = vector.load %arg6[%c0_12, %c0_13] : memref<128x128xf32, #tpu.memory_space<vmem>>, vector<128x128xf32>
    %cst_14 = arith.constant dense<0.000000e+00> : vector<128x128xf32>
    %16 = tpu.matmul %14, %15, %cst_14 {dimension_numbers = #tpu.dot_dimension_numbers<[1], [0], [0], [1], [0, 0, 1, 1], [], []>} : vector<128x128xf32>, vector<128x128xf32>, vector<128x128xf32> -> vector<128x128xf32>
    %c0_15 = arith.constant 0 : index
    %c0_16 = arith.constant 0 : index
    %17 = vector.load %arg7[%c0_15, %c0_16] : memref<1x128xf32, #tpu.memory_space<vmem>>, vector<1x128xf32>
    %18 = vector.broadcast %17 : vector<1x128xf32> to vector<128x128xf32>
    %19 = arith.addf %16, %18 : vector<128x128xf32>
    %20 = math.tanh %19 : vector<128x128xf32>
    %cst_17 = arith.constant 1.000000e+00 : f32
    %21 = vector.broadcast %cst_17 : f32 to vector<128x128xf32>
    %22 = arith.mulf %21, %20 : vector<128x128xf32>
    %c0_18 = arith.constant 0 : index
    %c0_19 = arith.constant 0 : index
    %23 = vector.load %arg8[%c0_18, %c0_19] : memref<128x128xf32, #tpu.memory_space<vmem>>, vector<128x128xf32>
    tpu.vector_store %arg8[%c0_18, %c0_19], %22 {strides = array<i32>} : memref<128x128xf32, #tpu.memory_space<vmem>>, vector<128x128xf32>,
    return
  }
  func.func @transform_0(%arg0: i32) -> (i32, i32) {
    %c0_i32 = arith.constant 0 : i32
    %c0_i32_0 = arith.constant 0 : i32
    return %arg0, %c0_i32 : i32, i32
  }
  func.func @transform_1(%arg0: i32) -> (i32, i32) {
    %c0_i32 = arith.constant 0 : i32
    %c0_i32_0 = arith.constant 0 : i32
    %c0_i32_1 = arith.constant 0 : i32
    return %c0_i32, %c0_i32_0 : i32, i32
  }
  func.func @transform_2(%arg0: i32) -> (i32, i32) {
    %c0_i32 = arith.constant 0 : i32
    %c0_i32_0 = arith.constant 0 : i32
    %c0_i32_1 = arith.constant 0 : i32
    return %c0_i32, %c0_i32_0 : i32, i32
  }
  func.func @transform_3(%arg0: i32) -> (i32, i32) {
    %c0_i32 = arith.constant 0 : i32
    %c0_i32_0 = arith.constant 0 : i32
    %c0_i32_1 = arith.constant 0 : i32
    return %c0_i32, %c0_i32_0 : i32, i32
  }
  func.func @transform_4(%arg0: i32) -> (i32, i32) {
    %c0_i32 = arith.constant 0 : i32
    %c0_i32_0 = arith.constant 0 : i32
    %c0_i32_1 = arith.constant 0 : i32
    return %c0_i32, %c0_i32_0 : i32, i32
  }
  func.func @transform_5(%arg0: i32) -> (i32, i32) {
    %c0_i32 = arith.constant 0 : i32
    %c0_i32_0 = arith.constant 0 : i32
    %c0_i32_1 = arith.constant 0 : i32
    return %c0_i32, %c0_i32_0 : i32, i32
  }
  func.func @transform_6(%arg0: i32) -> (i32, i32) {
    %c0_i32 = arith.constant 0 : i32
    %c0_i32_0 = arith.constant 0 : i32
    %c0_i32_1 = arith.constant 0 : i32
    return %c0_i32, %c0_i32_0 : i32, i32
  }
  func.func @transform_7(%arg0: i32) -> (i32, i32) {
    %c0_i32 = arith.constant 0 : i32
    %c0_i32_0 = arith.constant 0 : i32
    return %arg0, %c0_i32 : i32, i32
  }
}

</mosaic_0001>

<llo_original>
// kernel: actor_forward.1
$region0: #{actor_forward.1}
  #allocation0 [shape = 'u32[]', space=smem, size = 0x4, offset = 0x4, fixed_abs, tag = 'smem constant byte address 0x4 - core index']
  #allocation1 [shape = 'u32[144,128]{1,0:T(1,128)}', space=vmem, size = 0x12000, scoped, tag = 'internal scratch']
  %s0 = inlined_call_operand.vmem [shape: f32[256,39], index: 0, kind: input, shape index: {}]
  %s1 = inlined_call_operand.vmem [shape: f32[39,128], index: 1, kind: input, shape index: {}]
  %s2 = inlined_call_operand.vmem [shape: f32[1,128], index: 2, kind: input, shape index: {}]
  %s3 = inlined_call_operand.vmem [shape: f32[128,128], index: 3, kind: input, shape index: {}]
  %s4 = inlined_call_operand.vmem [shape: f32[1,128], index: 4, kind: input, shape index: {}]
  %s5 = inlined_call_operand.vmem [shape: f32[128,128], index: 5, kind: input, shape index: {}]
  %s6 = inlined_call_operand.vmem [shape: f32[1,128], index: 6, kind: input, shape index: {}]
  %s7 = inlined_call_operand.vmem [shape: f32[256,128], index: 7, kind: output, shape index: {}]
  %s8 = sld [smem:[#allocation0]]
  $region61: #{actor_forward.1} parent=0
    _
  %s10 = ssub.s32 1, %s8
  %s11 = scalar_select 0, %s10, %s8
  loop: start=0, step=1, limit=4
  $region2: #{actor_forward.1} parent=0 // loop_pre_header
    _
  $region3: #{actor_forward.1} parent=0 // loop_header
    %s13 = sphi 0, %s17
    %p14 = scmp.ge.s32.totalorder %s13, 4
    %s23 = sphi 0, %s25
    %s26 = sphi 0, %s23
    %s27 = sphi 0, %s26
    %s43 = sphi 0, %s27
    %s47 = sphi 0, %s47
    %s49 = sphi 0, %s47
    %s50 = sphi 0, %s49
    %s64 = sphi 0, %s50
    %s68 = sphi 0, %s68
    %s70 = sphi 0, %s68
    %s71 = sphi 0, %s70
    %s85 = sphi 0, %s71
    %s89 = sphi 0, %s89
    %s91 = sphi 0, %s89
    %s92 = sphi 0, %s91
    %s106 = sphi 0, %s92
    %s110 = sphi 0, %s110
    %s112 = sphi 0, %s110
    %s113 = sphi 0, %s112
    %s127 = sphi 0, %s113
    %s131 = sphi 0, %s131
    %s133 = sphi 0, %s131
    %s134 = sphi 0, %s133
    %s148 = sphi 0, %s134
    %s152 = sphi 0, %s152
    %s154 = sphi 0, %s152
    %s155 = sphi 0, %s154
    %s169 = sphi 0, %s155
    %s175 = sphi 0, %s177
    %s178 = sphi 0, %s175
    %s179 = sphi 0, %s178
    %s195 = sphi 0, %s179
  $region4: #{actor_forward.1} parent=0 // loop_header_branch
    %16 = sbr.rel (%p14) target = $region8
  $region5: #{actor_forward.1} parent=0 // loop_body
    %s18 = ssub.s32 %s13, 1
    %s19 = ssub.s32 %s13, 2
    %s20 = sadd.s32 %s13, 1
    %s21 = ssub.s32 %s13, %s20
    %p22 = scmp.eq.s32.totalorder %s21, 0
    %s24 = sadd.s32 %s23, 1
    %s25 = scalar_select %p22, %s23, %s24
    %p28 = pneg %p22
    %p29 = scmp.eq.s32.totalorder %s13, 1
    %p30 = por %p28, %p29
    %p31 = scmp.ne.s32.totalorder %s23, %s26
    %p32 = scmp.eq.s32.totalorder %s13, 0
    %p33 = por %p31, %p32
    %p34 = scmp.ne.s32.totalorder %s23, %s26
    %p35 = scmp.eq.s32.totalorder %s18, 1
    %p36 = por %p34, %p35
    %p37 = scmp.ne.s32.totalorder %s26, %s27
    %p38 = scmp.eq.s32.totalorder %s18, 0
    %p39 = por %p37, %p38
    %p40 = scmp.ne.s32.totalorder %s26, %s27
    %p41 = scmp.eq.s32.totalorder %s19, 1
    %p42 = por %p40, %p41
    %p44 = scmp.ne.s32.totalorder %s27, %s43
    %p45 = scmp.eq.s32.totalorder %s19, 0
    %p46 = por %p44, %p45
    %s48 = sadd.s32 %s47, 1
    %p51 = scmp.eq.s32.totalorder %s13, 1
    %p52 = scmp.ne.s32.totalorder %s47, %s49
    %p53 = scmp.eq.s32.totalorder %s13, 0
    %p54 = por %p52, %p53
    %p55 = scmp.ne.s32.totalorder %s47, %s49
    %p56 = scmp.eq.s32.totalorder %s18, 1
    %p57 = por %p55, %p56
    %p58 = scmp.ne.s32.totalorder %s49, %s50
    %p59 = scmp.eq.s32.totalorder %s18, 0
    %p60 = por %p58, %p59
    %p61 = scmp.ne.s32.totalorder %s49, %s50
    %p62 = scmp.eq.s32.totalorder %s19, 1
    %p63 = por %p61, %p62
    %p65 = scmp.ne.s32.totalorder %s50, %s64
    %p66 = scmp.eq.s32.totalorder %s19, 0
    %p67 = por %p65, %p66
    %s69 = sadd.s32 %s68, 1
    %p72 = scmp.eq.s32.totalorder %s13, 1
    %p73 = scmp.ne.s32.totalorder %s68, %s70
    %p74 = scmp.eq.s32.totalorder %s13, 0
    %p75 = por %p73, %p74
    %p76 = scmp.ne.s32.totalorder %s68, %s70
    %p77 = scmp.eq.s32.totalorder %s18, 1
    %p78 = por %p76, %p77
    %p79 = scmp.ne.s32.totalorder %s70, %s71
    %p80 = scmp.eq.s32.totalorder %s18, 0
    %p81 = por %p79, %p80
    %p82 = scmp.ne.s32.totalorder %s70, %s71
    %p83 = scmp.eq.s32.totalorder %s19, 1
    %p84 = por %p82, %p83
    %p86 = scmp.ne.s32.totalorder %s71, %s85
    %p87 = scmp.eq.s32.totalorder %s19, 0
    %p88 = por %p86, %p87
    %s90 = sadd.s32 %s89, 1
    %p93 = scmp.eq.s32.totalorder %s13, 1
    %p94 = scmp.ne.s32.totalorder %s89, %s91
    %p95 = scmp.eq.s32.totalorder %s13, 0
    %p96 = por %p94, %p95
    %p97 = scmp.ne.s32.totalorder %s89, %s91
    %p98 = scmp.eq.s32.totalorder %s18, 1
    %p99 = por %p97, %p98
    %p100 = scmp.ne.s32.totalorder %s91, %s92
    %p101 = scmp.eq.s32.totalorder %s18, 0
    %p102 = por %p100, %p101
    %p103 = scmp.ne.s32.totalorder %s91, %s92
    %p104 = scmp.eq.s32.totalorder %s19, 1
    %p105 = por %p103, %p104
    %p107 = scmp.ne.s32.totalorder %s92, %s106
    %p108 = scmp.eq.s32.totalorder %s19, 0
    %p109 = por %p107, %p108
    %s111 = sadd.s32 %s110, 1
    %p114 = scmp.eq.s32.totalorder %s13, 1
    %p115 = scmp.ne.s32.totalorder %s110, %s112
    %p116 = scmp.eq.s32.totalorder %s13, 0
    %p117 = por %p115, %p116
    %p118 = scmp.ne.s32.totalorder %s110, %s112
    %p119 = scmp.eq.s32.totalorder %s18, 1
    %p120 = por %p118, %p119
    %p121 = scmp.ne.s32.totalorder %s112, %s113
    %p122 = scmp.eq.s32.totalorder %s18, 0
    %p123 = por %p121, %p122
    %p124 = scmp.ne.s32.totalorder %s112, %s113
    %p125 = scmp.eq.s32.totalorder %s19, 1
    %p126 = por %p124, %p125
    %p128 = scmp.ne.s32.totalorder %s113, %s127
    %p129 = scmp.eq.s32.totalorder %s19, 0
    %p130 = por %p128, %p129
    %s132 = sadd.s32 %s131, 1
    %p135 = scmp.eq.s32.totalorder %s13, 1
    %p136 = scmp.ne.s32.totalorder %s131, %s133
    %p137 = scmp.eq.s32.totalorder %s13, 0
    %p138 = por %p136, %p137
    %p139 = scmp.ne.s32.totalorder %s131, %s133
    %p140 = scmp.eq.s32.totalorder %s18, 1
    %p141 = por %p139, %p140
    %p142 = scmp.ne.s32.totalorder %s133, %s134
    %p143 = scmp.eq.s32.totalorder %s18, 0
    %p144 = por %p142, %p143
    %p145 = scmp.ne.s32.totalorder %s133, %s134
    %p146 = scmp.eq.s32.totalorder %s19, 1
    %p147 = por %p145, %p146
    %p149 = scmp.ne.s32.totalorder %s134, %s148
    %p150 = scmp.eq.s32.totalorder %s19, 0
    %p151 = por %p149, %p150
    %s153 = sadd.s32 %s152, 1
    %p156 = scmp.eq.s32.totalorder %s13, 1
    %p157 = scmp.ne.s32.totalorder %s152, %s154
    %p158 = scmp.eq.s32.totalorder %s13, 0
    %p159 = por %p157, %p158
    %p160 = scmp.ne.s32.totalorder %s152, %s154
    %p161 = scmp.eq.s32.totalorder %s18, 1
    %p162 = por %p160, %p161
    %p163 = scmp.ne.s32.totalorder %s154, %s155
    %p164 = scmp.eq.s32.totalorder %s18, 0
    %p165 = por %p163, %p164
    %p166 = scmp.ne.s32.totalorder %s154, %s155
    %p167 = scmp.eq.s32.totalorder %s19, 1
    %p168 = por %p166, %p167
    %p170 = scmp.ne.s32.totalorder %s155, %s169
    %p171 = scmp.eq.s32.totalorder %s19, 0
    %p172 = por %p170, %p171
    %s173 = ssub.s32 %s13, %s20
    %p174 = scmp.eq.s32.totalorder %s173, 0
    %s176 = sadd.s32 %s175, 1
    %s177 = scalar_select %p174, %s175, %s176
    %p180 = pneg %p174
    %p181 = scmp.eq.s32.totalorder %s13, 1
    %p182 = por %p180, %p181
    %p183 = scmp.ne.s32.totalorder %s175, %s178
    %p184 = scmp.eq.s32.totalorder %s13, 0
    %p185 = por %p183, %p184
    %p186 = scmp.ne.s32.totalorder %s175, %s178
    %p187 = scmp.eq.s32.totalorder %s18, 1
    %p188 = por %p186, %p187
    %p189 = scmp.ne.s32.totalorder %s178, %s179
    %p190 = scmp.eq.s32.totalorder %s18, 0
    %p191 = por %p189, %p190
    %p192 = scmp.ne.s32.totalorder %s178, %s179
    %p193 = scmp.eq.s32.totalorder %s19, 1
    %p194 = por %p192, %p193
    %p196 = scmp.ne.s32.totalorder %s179, %s195
    %p197 = scmp.eq.s32.totalorder %s19, 0
    %p198 = por %p196, %p197
    %p199 = scmp.le.s32.totalorder 1, %s13
    %p200 = scmp.lt.s32.totalorder %s13, 3
    %p201 = pnand %p199, %p200
    %p202 = pneg %p201
    // Predicated region
    $region9: #{actor_forward.1} parent=5 // pred_check
      _
    $region10: #{actor_forward.1} parent=5 // pred_check_branch
      %204 = sbr.rel (%p201) target = $region12
    $region11: #{actor_forward.1} parent=5 // pred_region
      %s205 = ssub.s32 %s13, 1
      // Predicated region
      $region13: #{actor_forward.1} parent=11 // pred_check
        %p206 = pneg %p60
      $region14: #{actor_forward.1} parent=11 // pred_check_branch
        %208 = sbr.rel (%p206) target = $region16
      $region15: #{actor_forward.1} parent=11 // pred_region
        _
      $region16: #{actor_forward.1} parent=11 // pred_fallthru
        _
      // Predicated region
      $region17: #{actor_forward.1} parent=11 // pred_check
        %p209 = pneg %p81
      $region18: #{actor_forward.1} parent=11 // pred_check_branch
        %211 = sbr.rel (%p209) target = $region20
      $region19: #{actor_forward.1} parent=11 // pred_region
        _
      $region20: #{actor_forward.1} parent=11 // pred_fallthru
        _
      // Predicated region
      $region21: #{actor_forward.1} parent=11 // pred_check
        %p212 = pneg %p102
      $region22: #{actor_forward.1} parent=11 // pred_check_branch
        %214 = sbr.rel (%p212) target = $region24
      $region23: #{actor_forward.1} parent=11 // pred_region
        _
      $region24: #{actor_forward.1} parent=11 // pred_fallthru
        _
      // Predicated region
      $region25: #{actor_forward.1} parent=11 // pred_check
        %p215 = pneg %p123
      $region26: #{actor_forward.1} parent=11 // pred_check_branch
        %217 = sbr.rel (%p215) target = $region28
      $region27: #{actor_forward.1} parent=11 // pred_region
        _
      $region28: #{actor_forward.1} parent=11 // pred_fallthru
        _
      // Predicated region
      $region29: #{actor_forward.1} parent=11 // pred_check
        %p218 = pneg %p144
      $region30: #{actor_forward.1} parent=11 // pred_check_branch
        %220 = sbr.rel (%p218) target = $region32
      $region31: #{actor_forward.1} parent=11 // pred_region
        _
      $region32: #{actor_forward.1} parent=11 // pred_fallthru
        _
      // Predicated region
      $region33: #{actor_forward.1} parent=11 // pred_check
        %p221 = pneg %p165
      $region34: #{actor_forward.1} parent=11 // pred_check_branch
        %223 = sbr.rel (%p221) target = $region36
      $region35: #{actor_forward.1} parent=11 // pred_region
        _
      $region36: #{actor_forward.1} parent=11 // pred_fallthru
        _
    $region12: #{actor_forward.1} parent=5 // pred_fallthru
      _
    %p224 = scmp.lt.s32.totalorder %s13, 2
    // Predicated region
    $region37: #{actor_forward.1} parent=5 // pred_check
      %p225 = pneg %p224
    $region38: #{actor_forward.1} parent=5 // pred_check_branch
      %227 = sbr.rel (%p225) target = $region40
    $region39: #{actor_forward.1} parent=5 // pred_region
      // Predicated region
      $region41: #{actor_forward.1} parent=39 // pred_check
        %p228 = pneg %p33
      $region42: #{actor_forward.1} parent=39 // pred_check_branch
        %230 = sbr.rel (%p228) target = $region44
      $region43: #{actor_forward.1} parent=39 // pred_region
        %s231 = smul.u32 16, %s13
        %p232 = scmp.lt.s32.totalorder %s231, 31
        %s233 = scalar_select %p232, %s231, 31
        %s234 = smul.addr %s233, 8
        %s235 = scalar_lea.vmem %s0, %s234
        %s236 = smul.u32 16, %s13
      $region44: #{actor_forward.1} parent=39 // pred_fallthru
        _
    $region40: #{actor_forward.1} parent=5 // pred_fallthru
      _
    %p237 = scmp.le.s32.totalorder 1, %s13
    %p238 = scmp.lt.s32.totalorder %s13, 3
    %p239 = pnand %p237, %p238
    %p240 = pneg %p239
    // Predicated region
    $region45: #{actor_forward.1} parent=5 // pred_check
      _
    $region46: #{actor_forward.1} parent=5 // pred_check_branch
      %242 = sbr.rel (%p239) target = $region48
    $region47: #{actor_forward.1} parent=5 // pred_region
      %s243 = ssub.s32 %s13, 1
      %s244 = smul.u32 16, %s18
      %p245 = scmp.lt.s32.totalorder %s244, 31
      %s246 = scalar_select %p245, %s244, 31
      %s247 = smul.addr %s246, 8
      %s248 = scalar_lea.vmem %s0, %s247
      %p249 = pneg %p39
      %p250 = pneg %p36
      %p251 = pneg %p60
      %p252 = pneg %p57
      %p253 = pneg %p81
      %p254 = pneg %p78
      %p255 = pneg %p102
      %p256 = pneg %p99
      %p257 = pneg %p123
      %p258 = pneg %p120
      %p259 = pneg %p144
      %p260 = pneg %p141
      %p261 = pneg %p165
      %p262 = pneg %p162
      %p263 = pneg %p191
      %p264 = pneg %p188
      %s265 = smul.u32 16, %s18
      %p266 = scmp.lt.s32.totalorder %s265, 31
      %s267 = scalar_select %p266, %s265, 31
      %s268 = smul.addr %s267, 8
      %s269 = scalar_lea.vmem %s7, %s268
      %s270 = smul.u32 16, %s18
      %p271 = scmp.lt.s32.totalorder %s270, 31
      %s272 = scalar_select %p271, %s270, 31
      %s273 = smul.addr %s272, 8
      %s274 = scalar_lea.vmem %s0, %s273
      %s275 = smul.u32 16, %s18
      %s276 = smul.u32 16, %s18
      %p277 = scmp.lt.s32.totalorder %s276, 31
      %s278 = scalar_select %p277, %s276, 31
      %s279 = smul.addr %s278, 8
      %s280 = scalar_lea.vmem %s7, %s279
      %s281 = smul.u32 16, %s18
      %v282 = vld [vmem:[%s274] sm:$0xff]
      %v283 = vld [vmem:[%s274 + $0x8] sm:$0xff]
      %v284 = vld [vmem:[%s274 + $0x10] sm:$0xff]
      %v285 = vld [vmem:[%s274 + $0x18] sm:$0xff]
      %v286 = vld [vmem:[%s274 + $0x20] sm:$0xff]
      %v287 = vld [vmem:[%s274 + $0x28] sm:$0xff]
      %v288 = vld [vmem:[%s274 + $0x30] sm:$0xff]
      %v289 = vld [vmem:[%s274 + $0x38] sm:$0xff]
      %v290 = vld [vmem:[%s274 + $0x40] sm:$0xff]
      %v291 = vld [vmem:[%s274 + $0x48] sm:$0xff]
      %v292 = vld [vmem:[%s274 + $0x50] sm:$0xff]
      %v293 = vld [vmem:[%s274 + $0x58] sm:$0xff]
      %v294 = vld [vmem:[%s274 + $0x60] sm:$0xff]
      %v295 = vld [vmem:[%s274 + $0x68] sm:$0xff]
      %v296 = vld [vmem:[%s274 + $0x70] sm:$0xff]
      %v297 = vld [vmem:[%s274 + $0x78] sm:$0xff]
      %v298 = vld [vmem:[%s1] sm:$0xff]
      %v299 = vld [vmem:[%s1 + $0x8] sm:$0xff]
      %v300 = vld [vmem:[%s1 + $0x10] sm:$0xff]
      %v301 = vld [vmem:[%s1 + $0x18] sm:$0xff]
      %v302 = vld [vmem:[%s1 + $0x20] sm:$0x7f]
      %v303 = vld [vmem:[%s2] sm:$0x1]
      %v305 = vlaneseq
      %v306 = vshrl.u32 %v305, 7
      %v307 = vsub.s32 0, %v306
      %v308 = vrot.slane %v303, %v307
      %vm310 = vcmask 318464
      %v312 = vsel %vm310, %v282, 0
      %v315 = vsel %vm310, %v283, 0
      %v318 = vsel %vm310, %v284, 0
      %v321 = vsel %vm310, %v285, 0
      %v324 = vsel %vm310, %v286, 0
      %v327 = vsel %vm310, %v287, 0
      %v330 = vsel %vm310, %v288, 0
      %v333 = vsel %vm310, %v289, 0
      %v336 = vsel %vm310, %v290, 0
      %v339 = vsel %vm310, %v291, 0
      %v342 = vsel %vm310, %v292, 0
      %v345 = vsel %vm310, %v293, 0
      %v348 = vsel %vm310, %v294, 0
      %v351 = vsel %vm310, %v295, 0
      %v354 = vsel %vm310, %v296, 0
      %v357 = vsel %vm310, %v297, 0
      %vm359 = vcmask 1046528
      %v361 = vsel %vm359, %v302, 0
      %363 = vmatprep.subr.mxu0 0.0
      %364 = vmatpush1.msra.mxu0 %v298
      %365 = vmatprep.subr.mxu0 0.0
      %366 = vmatpush1.msra.mxu0 %v299
      %367 = vmatprep.subr.mxu0 0.0
      %368 = vmatpush1.msra.mxu0 %v300
      %369 = vmatprep.subr.mxu0 0.0
      %370 = vmatpush1.msra.mxu0 %v301
      %371 = vmatprep.subr.mxu0 0.0
      %372 = vmatpush1.msra.mxu0 %v361
      %373 = vmatprep.subr.mxu0 0.0
      %374 = vmatpush1.msra.mxu0 0.0
      %375 = vmatprep.subr.mxu0 0.0
      %376 = vmatpush1.msra.mxu0 0.0
      %377 = vmatprep.subr.mxu0 0.0
      %378 = vmatpush1.msra.mxu0 0.0
      %379 = vmatprep.subr.mxu0 0.0
      %380 = vmatpush1.msra.mxu0 0.0
      %381 = vmatprep.subr.mxu0 0.0
      %382 = vmatpush1.msra.mxu0 0.0
      %383 = vmatprep.subr.mxu0 0.0
      %384 = vmatpush1.msra.mxu0 0.0
      %385 = vmatprep.subr.mxu0 0.0
      %386 = vmatpush1.msra.mxu0 0.0
      %387 = vmatprep.subr.mxu0 0.0
      %388 = vmatpush1.msra.mxu0 0.0
      %389 = vmatprep.subr.mxu0 0.0
      %390 = vmatpush1.msra.mxu0 0.0
      %391 = vmatprep.subr.mxu0 0.0
      %392 = vmatpush1.msra.mxu0 0.0
      %393 = vmatprep.subr.mxu0 0.0
      %394 = vmatpush1.msra.mxu0 0.0
      %395 = vmatprep.subr.mxu0 0.0
      %396 = vmatpush1.msra.mxu0 0.0
      %397 = vmatprep.subr.mxu0 0.0
      %398 = vmatpush1.msra.mxu0 0.0
      %399 = vmatprep.subr.mxu0 0.0
      %400 = vmatpush1.msra.mxu0 0.0
      %401 = vmatprep.subr.mxu0 0.0
      %402 = vmatpush1.msra.mxu0 0.0
      %403 = vmatprep.subr.mxu0 0.0
      %404 = vmatpush1.msra.mxu0 0.0
      %405 = vmatprep.subr.mxu0 0.0
      %406 = vmatpush1.msra.mxu0 0.0
      %407 = vmatprep.subr.mxu0 0.0
      %408 = vmatpush1.msra.mxu0 0.0
      %409 = vmatprep.subr.mxu0 0.0
      %410 = vmatpush1.msra.mxu0 0.0
      %411 = vmatprep.subr.mxu0 0.0
      %412 = vmatpush1.msra.mxu0 0.0
      %413 = vmatprep.subr.mxu0 0.0
      %414 = vmatpush1.msra.mxu0 0.0
      %415 = vmatprep.subr.mxu0 0.0
      %416 = vmatpush1.msra.mxu0 0.0
      %417 = vmatprep.subr.mxu0 0.0
      %418 = vmatpush1.msra.mxu0 0.0
      %419 = vmatprep.subr.mxu0 0.0
      %420 = vmatpush1.msra.mxu0 0.0
      %421 = vmatprep.subr.mxu0 0.0
      %422 = vmatpush1.msra.mxu0 0.0
      %423 = vmatprep.subr.mxu0 0.0
      %424 = vmatpush1.msra.mxu0 0.0
      %425 = vmatprep.subr.mxu0 0.0
      %426 = vmatpush1.msra.mxu0 0.0
      %427 = vmatprep.mubr.f32.mxu0 0.0
      %428 = vmatmul.mubr.f32.gmra.mrb[0].mxu0 %v312
      %v429 = vpop.f32.mrb[0].mxu0
      %v430 = vadd.f32 %v308, %v429
      %v431 = vpop.f32.mrb[0].mxu0
      %432 = vmatprep.mubr.f32.mxu0 0.0
      %433 = vmatmul.mubr.f32.gmra.mrb[0].mxu0 %v315
      %v434 = vpop.f32.mrb[0].mxu0
      %v435 = vadd.f32 %v308, %v434
      %v436 = vpop.f32.mrb[0].mxu0
      %437 = vmatprep.mubr.f32.mxu0 0.0
      %438 = vmatmul.mubr.f32.gmra.mrb[0].mxu0 %v318
      %v439 = vpop.f32.mrb[0].mxu0
      %v440 = vadd.f32 %v308, %v439
      %v441 = vpop.f32.mrb[0].mxu0
      %442 = vmatprep.mubr.f32.mxu0 0.0
      %443 = vmatmul.mubr.f32.gmra.mrb[0].mxu0 %v321
      %v444 = vpop.f32.mrb[0].mxu0
      %v445 = vadd.f32 %v308, %v444
      %v446 = vpop.f32.mrb[0].mxu0
      %447 = vmatprep.mubr.f32.mxu0 0.0
      %448 = vmatmul.mubr.f32.gmra.mrb[0].mxu0 %v324
      %v449 = vpop.f32.mrb[0].mxu0
      %v450 = vadd.f32 %v308, %v449
      %v451 = vpop.f32.mrb[0].mxu0
      %452 = vmatprep.mubr.f32.mxu0 0.0
      %453 = vmatmul.mubr.f32.gmra.mrb[0].mxu0 %v327
      %v454 = vpop.f32.mrb[0].mxu0
      %v455 = vadd.f32 %v308, %v454
      %v456 = vpop.f32.mrb[0].mxu0
      %457 = vmatprep.mubr.f32.mxu0 0.0
      %458 = vmatmul.mubr.f32.gmra.mrb[0].mxu0 %v330
      %v459 = vpop.f32.mrb[0].mxu0
      %v460 = vadd.f32 %v308, %v459
      %v461 = vpop.f32.mrb[0].mxu0
      %462 = vmatprep.mubr.f32.mxu0 0.0
      %463 = vmatmul.mubr.f32.gmra.mrb[0].mxu0 %v333
      %v464 = vpop.f32.mrb[0].mxu0
      %v465 = vadd.f32 %v308, %v464
      %v466 = vpop.f32.mrb[0].mxu0
      %467 = vmatprep.mubr.f32.mxu0 0.0
      %468 = vmatmul.mubr.f32.gmra.mrb[0].mxu0 %v336
      %v469 = vpop.f32.mrb[0].mxu0
      %v470 = vadd.f32 %v308, %v469
      %v471 = vpop.f32.mrb[0].mxu0
      %472 = vmatprep.mubr.f32.mxu0 0.0
      %473 = vmatmul.mubr.f32.gmra.mrb[0].mxu0 %v339
      %v474 = vpop.f32.mrb[0].mxu0
      %v475 = vadd.f32 %v308, %v474
      %v476 = vpop.f32.mrb[0].mxu0
      %477 = vmatprep.mubr.f32.mxu0 0.0
      %478 = vmatmul.mubr.f32.gmra.mrb[0].mxu0 %v342
      %v479 = vpop.f32.mrb[0].mxu0
      %v480 = vadd.f32 %v308, %v479
      %v481 = vpop.f32.mrb[0].mxu0
      %482 = vmatprep.mubr.f32.mxu0 0.0
      %483 = vmatmul.mubr.f32.gmra.mrb[0].mxu0 %v345
      %v484 = vpop.f32.mrb[0].mxu0
      %v485 = vadd.f32 %v308, %v484
      %v486 = vpop.f32.mrb[0].mxu0
      %487 = vmatprep.mubr.f32.mxu0 0.0
      %488 = vmatmul.mubr.f32.gmra.mrb[0].mxu0 %v348
      %v489 = vpop.f32.mrb[0].mxu0
      %v490 = vadd.f32 %v308, %v489
      %v491 = vpop.f32.mrb[0].mxu0
      %492 = vmatprep.mubr.f32.mxu0 0.0
      %493 = vmatmul.mubr.f32.gmra.mrb[0].mxu0 %v351
      %v494 = vpop.f32.mrb[0].mxu0
      %v495 = vadd.f32 %v308, %v494
      %v496 = vpop.f32.mrb[0].mxu0
      %497 = vmatprep.mubr.f32.mxu0 0.0
      %498 = vmatmul.mubr.f32.gmra.mrb[0].mxu0 %v354
      %v499 = vpop.f32.mrb[0].mxu0
      %v500 = vadd.f32 %v308, %v499
      %v501 = vpop.f32.mrb[0].mxu0
      %502 = vmatprep.mubr.f32.mxu0 0.0
      %503 = vmatmul.mubr.f32.gmra.mrb[0].mxu0 %v357
      %v504 = vpop.f32.mrb[0].mxu0
      %v505 = vadd.f32 %v308, %v504
      %v506 = vpop.f32.mrb[0].mxu0
      %507 = vdwg.mxu0
      %v508 = vmax.f32 %v430, 0.0
      %v509 = vmax.f32 %v435, 0.0
      %v510 = vmax.f32 %v440, 0.0
      %v511 = vmax.f32 %v445, 0.0
      %v512 = vmax.f32 %v450, 0.0
      %v513 = vmax.f32 %v455, 0.0
      %v514 = vmax.f32 %v460, 0.0
      %v515 = vmax.f32 %v465, 0.0
      %v516 = vmax.f32 %v470, 0.0
      %v517 = vmax.f32 %v475, 0.0
      %v518 = vmax.f32 %v480, 0.0
      %v519 = vmax.f32 %v485, 0.0
      %v520 = vmax.f32 %v490, 0.0
      %v521 = vmax.f32 %v495, 0.0
      %v522 = vmax.f32 %v500, 0.0
      %v523 = vmax.f32 %v505, 0.0
      %v524 = vld [vmem:[%s3] sm:$0xff]
      %v525 = vld [vmem:[%s3 + $0x8] sm:$0xff]
      %v526 = vld [vmem:[%s3 + $0x10] sm:$0xff]
      %v527 = vld [vmem:[%s3 + $0x18] sm:$0xff]
      %v528 = vld [vmem:[%s3 + $0x20] sm:$0xff]
      %v529 = vld [vmem:[%s3 + $0x28] sm:$0xff]
      %v530 = vld [vmem:[%s3 + $0x30] sm:$0xff]
      %v531 = vld [vmem:[%s3 + $0x38] sm:$0xff]
      %v532 = vld [vmem:[%s3 + $0x40] sm:$0xff]
      %v533 = vld [vmem:[%s3 + $0x48] sm:$0xff]
      %v534 = vld [vmem:[%s3 + $0x50] sm:$0xff]
      %v535 = vld [vmem:[%s3 + $0x58] sm:$0xff]
      %v536 = vld [vmem:[%s3 + $0x60] sm:$0xff]
      %v537 = vld [vmem:[%s3 + $0x68] sm:$0xff]
      %v538 = vld [vmem:[%s3 + $0x70] sm:$0xff]
      %v539 = vld [vmem:[%s3 + $0x78] sm:$0xff]
      %v540 = vld [vmem:[%s4] sm:$0x1]
      %v542 = vlaneseq
      %v543 = vshrl.u32 %v542, 7
      %v544 = vsub.s32 0, %v543
      %v545 = vrot.slane %v540, %v544
      %547 = vmatprep.subr.mxu0 0.0
      %548 = vmatpush1.msra.mxu0 %v524
      %549 = vmatprep.subr.mxu0 0.0
      %550 = vmatpush1.msra.mxu0 %v525
      %551 = vmatprep.subr.mxu0 0.0
      %552 = vmatpush1.msra.mxu0 %v526
      %553 = vmatprep.subr.mxu0 0.0
      %554 = vmatpush1.msra.mxu0 %v527
      %555 = vmatprep.subr.mxu0 0.0
      %556 = vmatpush1.msra.mxu0 %v528
      %557 = vmatprep.subr.mxu0 0.0
      %558 = vmatpush1.msra.mxu0 %v529
      %559 = vmatprep.subr.mxu0 0.0
      %560 = vmatpush1.msra.mxu0 %v530
      %561 = vmatprep.subr.mxu0 0.0
      %562 = vmatpush1.msra.mxu0 %v531
      %563 = vmatprep.subr.mxu0 0.0
      %564 = vmatpush1.msra.mxu0 %v532
      %565 = vmatprep.subr.mxu0 0.0
      %566 = vmatpush1.msra.mxu0 %v533
      %567 = vmatprep.subr.mxu0 0.0
      %568 = vmatpush1.msra.mxu0 %v534
      %569 = vmatprep.subr.mxu0 0.0
      %570 = vmatpush1.msra.mxu0 %v535
      %571 = vmatprep.subr.mxu0 0.0
      %572 = vmatpush1.msra.mxu0 %v536
      %573 = vmatprep.subr.mxu0 0.0
      %574 = vmatpush1.msra.mxu0 %v537
      %575 = vmatprep.subr.mxu0 0.0
      %576 = vmatpush1.msra.mxu0 %v538
      %577 = vmatprep.subr.mxu0 0.0
      %578 = vmatpush1.msra.mxu0 %v539
      %579 = vmatprep.subr.mxu0 0.0
      %580 = vmatpush1.msra.mxu0 0.0
      %581 = vmatprep.subr.mxu0 0.0
      %582 = vmatpush1.msra.mxu0 0.0
      %583 = vmatprep.subr.mxu0 0.0
      %584 = vmatpush1.msra.mxu0 0.0
      %585 = vmatprep.subr.mxu0 0.0
      %586 = vmatpush1.msra.mxu0 0.0
      %587 = vmatprep.subr.mxu0 0.0
      %588 = vmatpush1.msra.mxu0 0.0
      %589 = vmatprep.subr.mxu0 0.0
      %590 = vmatpush1.msra.mxu0 0.0
      %591 = vmatprep.subr.mxu0 0.0
      %592 = vmatpush1.msra.mxu0 0.0
      %593 = vmatprep.subr.mxu0 0.0
      %594 = vmatpush1.msra.mxu0 0.0
      %595 = vmatprep.subr.mxu0 0.0
      %596 = vmatpush1.msra.mxu0 0.0
      %597 = vmatprep.subr.mxu0 0.0
      %598 = vmatpush1.msra.mxu0 0.0
      %599 = vmatprep.subr.mxu0 0.0
      %600 = vmatpush1.msra.mxu0 0.0
      %601 = vmatprep.subr.mxu0 0.0
      %602 = vmatpush1.msra.mxu0 0.0
      %603 = vmatprep.subr.mxu0 0.0
      %604 = vmatpush1.msra.mxu0 0.0
      %605 = vmatprep.subr.mxu0 0.0
      %606 = vmatpush1.msra.mxu0 0.0
      %607 = vmatprep.subr.mxu0 0.0
      %608 = vmatpush1.msra.mxu0 0.0
      %609 = vmatprep.subr.mxu0 0.0
      %610 = vmatpush1.msra.mxu0 0.0
      %611 = vmatprep.mubr.f32.mxu0 0.0
      %612 = vmatmul.mubr.f32.gmra.mrb[0].mxu0 %v508
      %v613 = vpop.f32.mrb[0].mxu0
      %v614 = vadd.f32 %v545, %v613
      %v615 = vpop.f32.mrb[0].mxu0
      %616 = vmatprep.mubr.f32.mxu0 0.0
      %617 = vmatmul.mubr.f32.gmra.mrb[0].mxu0 %v509
      %v618 = vpop.f32.mrb[0].mxu0
      %v619 = vadd.f32 %v545, %v618
      %v620 = vpop.f32.mrb[0].mxu0
      %621 = vmatprep.mubr.f32.mxu0 0.0
      %622 = vmatmul.mubr.f32.gmra.mrb[0].mxu0 %v510
      %v623 = vpop.f32.mrb[0].mxu0
      %v624 = vadd.f32 %v545, %v623
      %v625 = vpop.f32.mrb[0].mxu0
      %626 = vmatprep.mubr.f32.mxu0 0.0
      %627 = vmatmul.mubr.f32.gmra.mrb[0].mxu0 %v511
      %v628 = vpop.f32.mrb[0].mxu0
      %v629 = vadd.f32 %v545, %v628
      %v630 = vpop.f32.mrb[0].mxu0
      %631 = vmatprep.mubr.f32.mxu0 0.0
      %632 = vmatmul.mubr.f32.gmra.mrb[0].mxu0 %v512
      %v633 = vpop.f32.mrb[0].mxu0
      %v634 = vadd.f32 %v545, %v633
      %v635 = vpop.f32.mrb[0].mxu0
      %636 = vmatprep.mubr.f32.mxu0 0.0
      %637 = vmatmul.mubr.f32.gmra.mrb[0].mxu0 %v513
      %v638 = vpop.f32.mrb[0].mxu0
      %v639 = vadd.f32 %v545, %v638
      %v640 = vpop.f32.mrb[0].mxu0
      %641 = vmatprep.mubr.f32.mxu0 0.0
      %642 = vmatmul.mubr.f32.gmra.mrb[0].mxu0 %v514
      %v643 = vpop.f32.mrb[0].mxu0
      %v644 = vadd.f32 %v545, %v643
      %v645 = vpop.f32.mrb[0].mxu0
      %646 = vmatprep.mubr.f32.mxu0 0.0
      %647 = vmatmul.mubr.f32.gmra.mrb[0].mxu0 %v515
      %v648 = vpop.f32.mrb[0].mxu0
      %v649 = vadd.f32 %v545, %v648
      %v650 = vpop.f32.mrb[0].mxu0
      %651 = vmatprep.mubr.f32.mxu0 0.0
      %652 = vmatmul.mubr.f32.gmra.mrb[0].mxu0 %v516
      %v653 = vpop.f32.mrb[0].mxu0
      %v654 = vadd.f32 %v545, %v653
      %v655 = vpop.f32.mrb[0].mxu0
      %656 = vmatprep.mubr.f32.mxu0 0.0
      %657 = vmatmul.mubr.f32.gmra.mrb[0].mxu0 %v517
      %v658 = vpop.f32.mrb[0].mxu0
      %v659 = vadd.f32 %v545, %v658
      %v660 = vpop.f32.mrb[0].mxu0
      %661 = vmatprep.mubr.f32.mxu0 0.0
      %662 = vmatmul.mubr.f32.gmra.mrb[0].mxu0 %v518
      %v663 = vpop.f32.mrb[0].mxu0
      %v664 = vadd.f32 %v545, %v663
      %v665 = vpop.f32.mrb[0].mxu0
      %666 = vmatprep.mubr.f32.mxu0 0.0
      %667 = vmatmul.mubr.f32.gmra.mrb[0].mxu0 %v519
      %v668 = vpop.f32.mrb[0].mxu0
      %v669 = vadd.f32 %v545, %v668
      %v670 = vpop.f32.mrb[0].mxu0
      %671 = vmatprep.mubr.f32.mxu0 0.0
      %672 = vmatmul.mubr.f32.gmra.mrb[0].mxu0 %v520
      %v673 = vpop.f32.mrb[0].mxu0
      %v674 = vadd.f32 %v545, %v673
      %v675 = vpop.f32.mrb[0].mxu0
      %676 = vmatprep.mubr.f32.mxu0 0.0
      %677 = vmatmul.mubr.f32.gmra.mrb[0].mxu0 %v521
      %v678 = vpop.f32.mrb[0].mxu0
      %v679 = vadd.f32 %v545, %v678
      %v680 = vpop.f32.mrb[0].mxu0
      %681 = vmatprep.mubr.f32.mxu0 0.0
      %682 = vmatmul.mubr.f32.gmra.mrb[0].mxu0 %v522
      %v683 = vpop.f32.mrb[0].mxu0
      %v684 = vadd.f32 %v545, %v683
      %v685 = vpop.f32.mrb[0].mxu0
      %686 = vmatprep.mubr.f32.mxu0 0.0
      %687 = vmatmul.mubr.f32.gmra.mrb[0].mxu0 %v523
      %v688 = vpop.f32.mrb[0].mxu0
      %v689 = vadd.f32 %v545, %v688
      %v690 = vpop.f32.mrb[0].mxu0
      %691 = vdwg.mxu0
      %v692 = vmax.f32 %v614, 0.0
      %v693 = vmax.f32 %v619, 0.0
      %v694 = vmax.f32 %v624, 0.0
      %v695 = vmax.f32 %v629, 0.0
      %v696 = vmax.f32 %v634, 0.0
      %v697 = vmax.f32 %v639, 0.0
      %v698 = vmax.f32 %v644, 0.0
      %v699 = vmax.f32 %v649, 0.0
      %v700 = vmax.f32 %v654, 0.0
      %v701 = vmax.f32 %v659, 0.0
      %v702 = vmax.f32 %v664, 0.0
      %v703 = vmax.f32 %v669, 0.0
      %v704 = vmax.f32 %v674, 0.0
      %v705 = vmax.f32 %v679, 0.0
      %v706 = vmax.f32 %v684, 0.0
      %v707 = vmax.f32 %v689, 0.0
      %v708 = vld [vmem:[%s5] sm:$0xff]
      %v709 = vld [vmem:[%s5 + $0x8] sm:$0xff]
      %v710 = vld [vmem:[%s5 + $0x10] sm:$0xff]
      %v711 = vld [vmem:[%s5 + $0x18] sm:$0xff]
      %v712 = vld [vmem:[%s5 + $0x20] sm:$0xff]
      %v713 = vld [vmem:[%s5 + $0x28] sm:$0xff]
      %v714 = vld [vmem:[%s5 + $0x30] sm:$0xff]
      %v715 = vld [vmem:[%s5 + $0x38] sm:$0xff]
      %v716 = vld [vmem:[%s5 + $0x40] sm:$0xff]
      %v717 = vld [vmem:[%s5 + $0x48] sm:$0xff]
      %v718 = vld [vmem:[%s5 + $0x50] sm:$0xff]
      %v719 = vld [vmem:[%s5 + $0x58] sm:$0xff]
      %v720 = vld [vmem:[%s5 + $0x60] sm:$0xff]
      %v721 = vld [vmem:[%s5 + $0x68] sm:$0xff]
      %v722 = vld [vmem:[%s5 + $0x70] sm:$0xff]
      %v723 = vld [vmem:[%s5 + $0x78] sm:$0xff]
      %v724 = vld [vmem:[%s6] sm:$0x1]
      %v726 = vlaneseq
      %v727 = vshrl.u32 %v726, 7
      %v728 = vsub.s32 0, %v727
      %v729 = vrot.slane %v724, %v728
      %731 = vmatprep.subr.mxu0 0.0
      %732 = vmatpush1.msra.mxu0 %v708
      %733 = vmatprep.subr.mxu0 0.0
      %734 = vmatpush1.msra.mxu0 %v709
      %735 = vmatprep.subr.mxu0 0.0
      %736 = vmatpush1.msra.mxu0 %v710
      %737 = vmatprep.subr.mxu0 0.0
      %738 = vmatpush1.msra.mxu0 %v711
      %739 = vmatprep.subr.mxu0 0.0
      %740 = vmatpush1.msra.mxu0 %v712
      %741 = vmatprep.subr.mxu0 0.0
      %742 = vmatpush1.msra.mxu0 %v713
      %743 = vmatprep.subr.mxu0 0.0
      %744 = vmatpush1.msra.mxu0 %v714
      %745 = vmatprep.subr.mxu0 0.0
      %746 = vmatpush1.msra.mxu0 %v715
      %747 = vmatprep.subr.mxu0 0.0
      %748 = vmatpush1.msra.mxu0 %v716
      %749 = vmatprep.subr.mxu0 0.0
      %750 = vmatpush1.msra.mxu0 %v717
      %751 = vmatprep.subr.mxu0 0.0
      %752 = vmatpush1.msra.mxu0 %v718
      %753 = vmatprep.subr.mxu0 0.0
      %754 = vmatpush1.msra.mxu0 %v719
      %755 = vmatprep.subr.mxu0 0.0
      %756 = vmatpush1.msra.mxu0 %v720
      %757 = vmatprep.subr.mxu0 0.0
      %758 = vmatpush1.msra.mxu0 %v721
      %759 = vmatprep.subr.mxu0 0.0
      %760 = vmatpush1.msra.mxu0 %v722
      %761 = vmatprep.subr.mxu0 0.0
      %762 = vmatpush1.msra.mxu0 %v723
      %763 = vmatprep.subr.mxu0 0.0
      %764 = vmatpush1.msra.mxu0 0.0
      %765 = vmatprep.subr.mxu0 0.0
      %766 = vmatpush1.msra.mxu0 0.0
      %767 = vmatprep.subr.mxu0 0.0
      %768 = vmatpush1.msra.mxu0 0.0
      %769 = vmatprep.subr.mxu0 0.0
      %770 = vmatpush1.msra.mxu0 0.0
      %771 = vmatprep.subr.mxu0 0.0
      %772 = vmatpush1.msra.mxu0 0.0
      %773 = vmatprep.subr.mxu0 0.0
      %774 = vmatpush1.msra.mxu0 0.0
      %775 = vmatprep.subr.mxu0 0.0
      %776 = vmatpush1.msra.mxu0 0.0
      %777 = vmatprep.subr.mxu0 0.0
      %778 = vmatpush1.msra.mxu0 0.0
      %779 = vmatprep.subr.mxu0 0.0
      %780 = vmatpush1.msra.mxu0 0.0
      %781 = vmatprep.subr.mxu0 0.0
      %782 = vmatpush1.msra.mxu0 0.0
      %783 = vmatprep.subr.mxu0 0.0
      %784 = vmatpush1.msra.mxu0 0.0
      %785 = vmatprep.subr.mxu0 0.0
      %786 = vmatpush1.msra.mxu0 0.0
      %787 = vmatprep.subr.mxu0 0.0
      %788 = vmatpush1.msra.mxu0 0.0
      %789 = vmatprep.subr.mxu0 0.0
      %790 = vmatpush1.msra.mxu0 0.0
      %791 = vmatprep.subr.mxu0 0.0
      %792 = vmatpush1.msra.mxu0 0.0
      %793 = vmatprep.subr.mxu0 0.0
      %794 = vmatpush1.msra.mxu0 0.0
      %795 = vmatprep.mubr.f32.mxu0 0.0
      %796 = vmatmul.mubr.f32.gmra.mrb[0].mxu0 %v692
      %v797 = vpop.f32.mrb[0].mxu0
      %v798 = vadd.f32 %v729, %v797
      %v799 = vpop.f32.mrb[0].mxu0
      %800 = vmatprep.mubr.f32.mxu0 0.0
      %801 = vmatmul.mubr.f32.gmra.mrb[0].mxu0 %v693
      %v802 = vpop.f32.mrb[0].mxu0
      %v803 = vadd.f32 %v729, %v802
      %v804 = vpop.f32.mrb[0].mxu0
      %805 = vmatprep.mubr.f32.mxu0 0.0
      %806 = vmatmul.mubr.f32.gmra.mrb[0].mxu0 %v694
      %v807 = vpop.f32.mrb[0].mxu0
      %v808 = vadd.f32 %v729, %v807
      %v809 = vpop.f32.mrb[0].mxu0
      %810 = vmatprep.mubr.f32.mxu0 0.0
      %811 = vmatmul.mubr.f32.gmra.mrb[0].mxu0 %v695
      %v812 = vpop.f32.mrb[0].mxu0
      %v813 = vadd.f32 %v729, %v812
      %v814 = vpop.f32.mrb[0].mxu0
      %815 = vmatprep.mubr.f32.mxu0 0.0
      %816 = vmatmul.mubr.f32.gmra.mrb[0].mxu0 %v696
      %v817 = vpop.f32.mrb[0].mxu0
      %v818 = vadd.f32 %v729, %v817
      %v819 = vpop.f32.mrb[0].mxu0
      %820 = vmatprep.mubr.f32.mxu0 0.0
      %821 = vmatmul.mubr.f32.gmra.mrb[0].mxu0 %v697
      %v822 = vpop.f32.mrb[0].mxu0
      %v823 = vadd.f32 %v729, %v822
      %v824 = vpop.f32.mrb[0].mxu0
      %825 = vmatprep.mubr.f32.mxu0 0.0
      %826 = vmatmul.mubr.f32.gmra.mrb[0].mxu0 %v698
      %v827 = vpop.f32.mrb[0].mxu0
      %v828 = vadd.f32 %v729, %v827
      %v829 = vpop.f32.mrb[0].mxu0
      %830 = vmatprep.mubr.f32.mxu0 0.0
      %831 = vmatmul.mubr.f32.gmra.mrb[0].mxu0 %v699
      %v832 = vpop.f32.mrb[0].mxu0
      %v833 = vadd.f32 %v729, %v832
      %v834 = vpop.f32.mrb[0].mxu0
      %835 = vmatprep.mubr.f32.mxu0 0.0
      %836 = vmatmul.mubr.f32.gmra.mrb[0].mxu0 %v700
      %v837 = vpop.f32.mrb[0].mxu0
      %v838 = vadd.f32 %v729, %v837
      %v839 = vpop.f32.mrb[0].mxu0
      %840 = vmatprep.mubr.f32.mxu0 0.0
      %841 = vmatmul.mubr.f32.gmra.mrb[0].mxu0 %v701
      %v842 = vpop.f32.mrb[0].mxu0
      %v843 = vadd.f32 %v729, %v842
      %v844 = vpop.f32.mrb[0].mxu0
      %845 = vmatprep.mubr.f32.mxu0 0.0
      %846 = vmatmul.mubr.f32.gmra.mrb[0].mxu0 %v702
      %v847 = vpop.f32.mrb[0].mxu0
      %v848 = vadd.f32 %v729, %v847
      %v849 = vpop.f32.mrb[0].mxu0
      %850 = vmatprep.mubr.f32.mxu0 0.0
      %851 = vmatmul.mubr.f32.gmra.mrb[0].mxu0 %v703
      %v852 = vpop.f32.mrb[0].mxu0
      %v853 = vadd.f32 %v729, %v852
      %v854 = vpop.f32.mrb[0].mxu0
      %855 = vmatprep.mubr.f32.mxu0 0.0
      %856 = vmatmul.mubr.f32.gmra.mrb[0].mxu0 %v704
      %v857 = vpop.f32.mrb[0].mxu0
      %v858 = vadd.f32 %v729, %v857
      %v859 = vpop.f32.mrb[0].mxu0
      %860 = vmatprep.mubr.f32.mxu0 0.0
      %861 = vmatmul.mubr.f32.gmra.mrb[0].mxu0 %v705
      %v862 = vpop.f32.mrb[0].mxu0
      %v863 = vadd.f32 %v729, %v862
      %v864 = vpop.f32.mrb[0].mxu0
      %865 = vmatprep.mubr.f32.mxu0 0.0
      %866 = vmatmul.mubr.f32.gmra.mrb[0].mxu0 %v706
      %v867 = vpop.f32.mrb[0].mxu0
      %v868 = vadd.f32 %v729, %v867
      %v869 = vpop.f32.mrb[0].mxu0
      %870 = vmatprep.mubr.f32.mxu0 0.0
      %871 = vmatmul.mubr.f32.gmra.mrb[0].mxu0 %v707
      %v872 = vpop.f32.mrb[0].mxu0
      %v873 = vadd.f32 %v729, %v872
      %v874 = vpop.f32.mrb[0].mxu0
      %875 = vdwg.mxu0
      %v876 = vtanh.pop %v798
      %v877 = vtanh.pop %v803
      %v878 = vtanh.pop %v808
      %v879 = vtanh.pop %v813
      %v880 = vtanh.pop %v818
      %v881 = vtanh.pop %v823
      %v882 = vtanh.pop %v828
      %v883 = vtanh.pop %v833
      %v884 = vtanh.pop %v838
      %v885 = vtanh.pop %v843
      %v886 = vtanh.pop %v848
      %v887 = vtanh.pop %v853
      %v888 = vtanh.pop %v858
      %v889 = vtanh.pop %v863
      %v890 = vtanh.pop %v868
      %v891 = vtanh.pop %v873
      %892 = vst [vmem:[%s280] sm:$0xff] %v876
      %893 = vst [vmem:[%s280 + $0x8] sm:$0xff] %v877
      %894 = vst [vmem:[%s280 + $0x10] sm:$0xff] %v878
      %895 = vst [vmem:[%s280 + $0x18] sm:$0xff] %v879
      %896 = vst [vmem:[%s280 + $0x20] sm:$0xff] %v880
      %897 = vst [vmem:[%s280 + $0x28] sm:$0xff] %v881
      %898 = vst [vmem:[%s280 + $0x30] sm:$0xff] %v882
      %899 = vst [vmem:[%s280 + $0x38] sm:$0xff] %v883
      %900 = vst [vmem:[%s280 + $0x40] sm:$0xff] %v884
      %901 = vst [vmem:[%s280 + $0x48] sm:$0xff] %v885
      %902 = vst [vmem:[%s280 + $0x50] sm:$0xff] %v886
      %903 = vst [vmem:[%s280 + $0x58] sm:$0xff] %v887
      %904 = vst [vmem:[%s280 + $0x60] sm:$0xff] %v888
      %905 = vst [vmem:[%s280 + $0x68] sm:$0xff] %v889
      %906 = vst [vmem:[%s280 + $0x70] sm:$0xff] %v890
      %907 = vst [vmem:[%s280 + $0x78] sm:$0xff] %v891
      %s908 = smul.u32 16, %s18
      %p909 = scmp.lt.s32.totalorder %s908, 31
      %s910 = scalar_select %p909, %s908, 31
      %s911 = smul.addr %s910, 8
      %s912 = scalar_lea.vmem %s7, %s911
      // Predicated region
      $region49: #{actor_forward.1} parent=47 // pred_check
        %p913 = pneg %p188
      $region50: #{actor_forward.1} parent=47 // pred_check_branch
        %915 = sbr.rel (%p913) target = $region52
      $region51: #{actor_forward.1} parent=47 // pred_region
        %s916 = smul.u32 16, %s18
      $region52: #{actor_forward.1} parent=47 // pred_fallthru
        _
    $region48: #{actor_forward.1} parent=5 // pred_fallthru
      _
    %p917 = scmp.le.s32.totalorder 2, %s13
    // Predicated region
    $region53: #{actor_forward.1} parent=5 // pred_check
      %p918 = pneg %p917
    $region54: #{actor_forward.1} parent=5 // pred_check_branch
      %920 = sbr.rel (%p918) target = $region56
    $region55: #{actor_forward.1} parent=5 // pred_region
      %s921 = ssub.s32 %s13, 2
      // Predicated region
      $region57: #{actor_forward.1} parent=55 // pred_check
        %p922 = pneg %p194
      $region58: #{actor_forward.1} parent=55 // pred_check_branch
        %924 = sbr.rel (%p922) target = $region60
      $region59: #{actor_forward.1} parent=55 // pred_region
        %s925 = smul.u32 16, %s19
        %p926 = scmp.lt.s32.totalorder %s925, 31
        %s927 = scalar_select %p926, %s925, 31
        %s928 = smul.addr %s927, 8
        %s929 = scalar_lea.vmem %s7, %s928
      $region60: #{actor_forward.1} parent=55 // pred_fallthru
        _
    $region56: #{actor_forward.1} parent=5 // pred_fallthru
      _
  $region6: #{actor_forward.1} parent=0 // loop_footer
    %s17 = sadd.s32 1, %s13
  $region7: #{actor_forward.1} parent=0 // loop_footer_branch
    %12 = sbr.rel target = $region3
  $region8: #{actor_forward.1} parent=0 // loop_exit
    _

</llo_original>
